<compile_context>
chip_gen: v7x
topology: tpu7x:2x2x1
jax: 0.10.0
libtpu: 0.0.40
codegen_flags: <defaults>
</compile_context>

<pallas_src>
import functools

import jax
import jax.numpy as jnp
from jax import lax
from jax.experimental import pallas as pl
from jax.experimental.pallas import tpu as pltpu


def _round_up(x, m):
    return ((x + m - 1) // m) * m


# ----------------------------------------------------------------------------
# Kernel 1: fused input projection for all timesteps at once
#   gi = (x @ Wv + bv) @ Wih + bih        tiled over M = seq_len * batch_pad
# ----------------------------------------------------------------------------
def _proj_gi_kernel(x_ref, wv_ref, bv_ref, wih_ref, bih_ref, gi_ref):
    proj = jnp.dot(x_ref[...], wv_ref[...],
                   preferred_element_type=jnp.float32) + bv_ref[...]
    gi = jnp.dot(proj, wih_ref[...],
                 preferred_element_type=jnp.float32) + bih_ref[...]
    gi_ref[...] = gi.astype(gi_ref.dtype)


def proj_gi(x2d, wv_t, bv, wih_t, bih, *, tm):
    Mp, D = x2d.shape
    Hp = wv_t.shape[1]
    G = wih_t.shape[1]  # 3 * Hp
    return pl.pallas_call(
        _proj_gi_kernel,
        out_shape=jax.ShapeDtypeStruct((Mp, G), jnp.float32),
        grid=(Mp // tm,),
        in_specs=[
            pl.BlockSpec((tm, D), lambda m: (m, 0)),
            pl.BlockSpec((D, Hp), lambda m: (0, 0)),
            pl.BlockSpec((1, Hp), lambda m: (0, 0)),
            pl.BlockSpec((Hp, G), lambda m: (0, 0)),
            pl.BlockSpec((1, G), lambda m: (0, 0)),
        ],
        out_specs=pl.BlockSpec((tm, G), lambda m: (m, 0)),
        compiler_params=pltpu.CompilerParams(
            dimension_semantics=("parallel",)),
    )(x2d, wv_t, bv, wih_t, bih)


# ----------------------------------------------------------------------------
# Kernel 2: GRU recurrence (only the h-dependent part), chunked over time.
# gi already contains W_ih @ x_t + b_ih with gates at 128-aligned lane offsets.
# PyTorch gate order is (r, z, n).
# ----------------------------------------------------------------------------
def _gru_kernel(gi_ref, whh_ref, bhh_ref, out_ref, h_scratch, *, hp, t_chunk):
    c = pl.program_id(0)

    @pl.when(c == 0)
    def _():
        h_scratch[...] = jnp.zeros_like(h_scratch)

    whh = whh_ref[...]          # (Hp, 3Hp), loaded once per chunk
    bhh = bhh_ref[...]          # (1, 3Hp)

    def step(tt, h):
        gi = gi_ref[tt]                                           # (Bp, 3Hp)
        gh = jnp.dot(h, whh, preferred_element_type=jnp.float32) + bhh
        r = jax.nn.sigmoid(gi[:, 0:hp] + gh[:, 0:hp])
        z = jax.nn.sigmoid(gi[:, hp:2 * hp] + gh[:, hp:2 * hp])
        n = jnp.tanh(gi[:, 2 * hp:3 * hp] + r * gh[:, 2 * hp:3 * hp])
        h_new = (1.0 - z) * n + z * h
        out_ref[tt] = h_new.astype(out_ref.dtype)                 # lane-dense (Bp, Hp)
        return h_new

    h_last = lax.fori_loop(0, t_chunk, step, h_scratch[...], unroll=True)
    h_scratch[...] = h_last


def gru_forward(gi, whh_t, bhh, *, t_chunk):
    # gi: (Sp, Bp, 3Hp) time-major; whh_t: (Hp, 3Hp); bhh: (1, 3Hp)
    Sp, Bp, G = gi.shape
    Hp = whh_t.shape[0]
    kernel = functools.partial(_gru_kernel, hp=Hp, t_chunk=t_chunk)
    # TODO(synk): constant weight/bias blocks are still default double-buffered;
    # negligible at Hp=128 but worth pl.Buffered(1) for very large hidden dims.
    return pl.pallas_call(
        kernel,
        out_shape=jax.ShapeDtypeStruct((Sp, Bp, Hp), jnp.float32),
        grid=(Sp // t_chunk,),
        in_specs=[
            pl.BlockSpec((t_chunk, Bp, G), lambda c: (c, 0, 0)),
            pl.BlockSpec((Hp, G), lambda c: (0, 0)),
            pl.BlockSpec((1, G), lambda c: (0, 0)),
        ],
        out_specs=pl.BlockSpec((t_chunk, Bp, Hp), lambda c: (c, 0, 0)),
        scratch_shapes=[pltpu.VMEM((Bp, Hp), jnp.float32)],
        compiler_params=pltpu.CompilerParams(
            dimension_semantics=("arbitrary",)),  # true time recurrence
    )(gi, whh_t, bhh)


# ----------------------------------------------------------------------------
# EncoderRNN forward (parameters created deterministically in-script)
# ----------------------------------------------------------------------------
class EncoderRNNPallas:
    def __init__(self, dim_vid, dim_hidden, key):
        self.dim_vid = dim_vid
        self.dim_hidden = dim_hidden
        H = dim_hidden
        Hp = _round_up(H, 128)
        self.hp = Hp
        k = jax.random.split(key, 6)

        # --- raw parameters (PyTorch layouts / init distributions) ---
        xavier_std = (2.0 / (dim_vid + H)) ** 0.5
        w_vid2hid = jax.random.normal(k[0], (H, dim_vid), jnp.float32) * xavier_std
        bound = 1.0 / (dim_vid ** 0.5)
        b_vid2hid = jax.random.uniform(k[1], (H,), jnp.float32, -bound, bound)
        stdv = 1.0 / (H ** 0.5)
        w_ih = jax.random.uniform(k[2], (3 * H, H), jnp.float32, -stdv, stdv)
        w_hh = jax.random.uniform(k[3], (3 * H, H), jnp.float32, -stdv, stdv)
        b_ih = jax.random.uniform(k[4], (3 * H,), jnp.float32, -stdv, stdv)
        b_hh = jax.random.uniform(k[5], (3 * H,), jnp.float32, -stdv, stdv)

        # --- precomputed padded / pre-transposed kernel operands (done once) ---
        self.w_vid2hid_t = jnp.zeros((dim_vid, Hp), jnp.float32).at[:, :H].set(w_vid2hid.T)
        self.b_vid2hid = jnp.zeros((1, Hp), jnp.float32).at[0, :H].set(b_vid2hid)
        self.w_ih_t = self._pad_gates_t(w_ih.T, H, Hp)   # (Hp, 3Hp)
        self.w_hh_t = self._pad_gates_t(w_hh.T, H, Hp)   # (Hp, 3Hp)
        self.b_ih = self._pad_gates_b(b_ih, H, Hp)       # (1, 3Hp)
        self.b_hh = self._pad_gates_b(b_hh, H, Hp)       # (1, 3Hp)

    @staticmethod
    def _pad_gates_t(w_t, H, Hp):
        # w_t: (H, 3H) -> (Hp, 3Hp), gate g at columns [g*Hp, g*Hp + H), zeros elsewhere.
        out = jnp.zeros((Hp, 3 * Hp), jnp.float32)
        for g in range(3):
            out = out.at[:H, g * Hp:g * Hp + H].set(w_t[:, g * H:(g + 1) * H])
        return out

    @staticmethod
    def _pad_gates_b(b, H, Hp):
        out = jnp.zeros((1, 3 * Hp), jnp.float32)
        for g in range(3):
            out = out.at[0, g * Hp:g * Hp + H].set(b[g * H:(g + 1) * H])
        return out

    def __call__(self, vid_feats):
        B, S, D = vid_feats.shape
        H, Hp = self.dim_hidden, self.hp
        Bp = _round_up(B, 8)

        # input_dropout / rnn dropout: identity in eval mode.
        # TODO(synk): training-mode dropout (input_dropout_p / rnn_dropout_p) not implemented.

        # Time-major layout, batch padded to a sublane multiple. Padded lanes /
        # rows stay zero through the recurrence (weights & biases zero-padded).
        x = jnp.swapaxes(vid_feats, 0, 1)                     # (S, B, D)
        x = jnp.pad(x, ((0, 0), (0, Bp - B), (0, 0)))         # (S, Bp, D)

        # --- fused vid2hid + input-side GRU projection (one big tiled matmul) ---
        M = S * Bp
        tm = min(256, M)                                      # M is a multiple of 8
        Mp = _round_up(M, tm)
        x2d = x.reshape(M, D)
        if Mp > M:
            x2d = jnp.pad(x2d, ((0, Mp - M), (0, 0)))
        gi = proj_gi(x2d, self.w_vid2hid_t, self.b_vid2hid,
                     self.w_ih_t, self.b_ih, tm=tm)           # (Mp, 3Hp)
        gi = gi[:M].reshape(S, Bp, 3 * Hp)

        # --- sequential GRU recurrence, chunked over time ---
        t_chunk = min(16, S)
        Sp = _round_up(S, t_chunk)
        if Sp > S:
            gi = jnp.pad(gi, ((0, Sp - S), (0, 0), (0, 0)))
        out_tmajor = gru_forward(gi, self.w_hh_t, self.b_hh,
                                 t_chunk=t_chunk)             # (Sp, Bp, Hp)

        output = jnp.swapaxes(out_tmajor[:S, :B, :H], 0, 1)   # (B, S, H)
        hidden = output[:, -1, :][None]                       # (1, B, H)
        return output, hidden


if __name__ == "__main__":
    key = jax.random.PRNGKey(0)
    k_param, k_in = jax.random.split(key)

    batch, seq_len, dim_vid, dim_hidden = 2, 8, 64, 32
    model = EncoderRNNPallas(dim_vid, dim_hidden, k_param)
    vid_feats = jax.random.normal(k_in, (batch, seq_len, dim_vid), jnp.float32)

    output, hidden = model(vid_feats)
    jax.block_until_ready((output, hidden))

    assert output.shape == (batch, seq_len, dim_hidden)
    assert hidden.shape == (1, batch, dim_hidden)
    assert bool(jnp.all(jnp.isfinite(output))) and bool(jnp.all(jnp.isfinite(hidden)))
    print("KERNEL_OK")
</pallas_src>

<mosaic_0001>
module attributes {stable_mosaic.version = 11 : i64} {
  func.func @_proj_gi_kernel(%arg0: i32, %arg1: memref<64x64xf32, #tpu.memory_space<vmem>>, %arg2: memref<64x128xf32, #tpu.memory_space<vmem>>, %arg3: memref<1x128xf32, #tpu.memory_space<vmem>>, %arg4: memref<128x384xf32, #tpu.memory_space<vmem>>, %arg5: memref<1x384xf32, #tpu.memory_space<vmem>>, %arg6: memref<64x384xf32, #tpu.memory_space<vmem>>) attributes {dimension_semantics = [#tpu.dimension_semantics<parallel>], iteration_bounds = array<i64: 1>, scalar_prefetch = 0 : i64, scratch_operands = 0 : i64, tpu.core_type = #tpu.core_type<tc>, window_params = [{transform_indices = @transform_0, window_bounds = array<i64: 64, 64>}, {pipeline_mode = #tpu.pipeline_mode<synchronous>, transform_indices = @transform_1, window_bounds = array<i64: 64, 128>}, {pipeline_mode = #tpu.pipeline_mode<synchronous>, transform_indices = @transform_2, window_bounds = array<i64: 1, 128>}, {pipeline_mode = #tpu.pipeline_mode<synchronous>, transform_indices = @transform_3, window_bounds = array<i64: 128, 384>}, {pipeline_mode = #tpu.pipeline_mode<synchronous>, transform_indices = @transform_4, window_bounds = array<i64: 1, 384>}, {transform_indices = @transform_5, window_bounds = array<i64: 64, 384>}]} {
    %c0 = arith.constant 0 : index
    %c0_0 = arith.constant 0 : index
    %0 = vector.load %arg1[%c0, %c0_0] : memref<64x64xf32, #tpu.memory_space<vmem>>, vector<64x64xf32>
    %c0_1 = arith.constant 0 : index
    %c0_2 = arith.constant 0 : index
    %1 = vector.load %arg2[%c0_1, %c0_2] : memref<64x128xf32, #tpu.memory_space<vmem>>, vector<64x128xf32>
    %cst = arith.constant dense<0.000000e+00> : vector<64x128xf32>
    %2 = tpu.matmul %0, %1, %cst {dimension_numbers = #tpu.dot_dimension_numbers<[1], [0], [0], [1], [0, 0, 1, 1], [], []>} : vector<64x64xf32>, vector<64x128xf32>, vector<64x128xf32> -> vector<64x128xf32>
    %c0_3 = arith.constant 0 : index
    %c0_4 = arith.constant 0 : index
    %3 = vector.load %arg3[%c0_3, %c0_4] : memref<1x128xf32, #tpu.memory_space<vmem>>, vector<1x128xf32>
    %4 = vector.broadcast %3 : vector<1x128xf32> to vector<64x128xf32>
    %5 = arith.addf %2, %4 : vector<64x128xf32>
    %c0_5 = arith.constant 0 : index
    %c0_6 = arith.constant 0 : index
    %6 = vector.load %arg4[%c0_5, %c0_6] : memref<128x384xf32, #tpu.memory_space<vmem>>, vector<128x384xf32>
    %cst_7 = arith.constant dense<0.000000e+00> : vector<64x384xf32>
    %7 = tpu.matmul %5, %6, %cst_7 {dimension_numbers = #tpu.dot_dimension_numbers<[1], [0], [0], [1], [0, 0, 1, 1], [], []>} : vector<64x128xf32>, vector<128x384xf32>, vector<64x384xf32> -> vector<64x384xf32>
    %c0_8 = arith.constant 0 : index
    %c0_9 = arith.constant 0 : index
    %8 = vector.load %arg5[%c0_8, %c0_9] : memref<1x384xf32, #tpu.memory_space<vmem>>, vector<1x384xf32>
    %9 = vector.broadcast %8 : vector<1x384xf32> to vector<64x384xf32>
    %10 = arith.addf %7, %9 : vector<64x384xf32>
    %c0_10 = arith.constant 0 : index
    %c0_11 = arith.constant 0 : index
    %11 = vector.load %arg6[%c0_10, %c0_11] : memref<64x384xf32, #tpu.memory_space<vmem>>, vector<64x384xf32>
    tpu.vector_store %arg6[%c0_10, %c0_11], %10 {strides = array<i32>} : memref<64x384xf32, #tpu.memory_space<vmem>>, vector<64x384xf32>,
    return
  }
  func.func @transform_0(%arg0: i32) -> (i32, i32) {
    %c0_i32 = arith.constant 0 : i32
    %c0_i32_0 = arith.constant 0 : i32
    return %arg0, %c0_i32 : i32, i32
  }
  func.func @transform_1(%arg0: i32) -> (i32, i32) {
    %c0_i32 = arith.constant 0 : i32
    %c0_i32_0 = arith.constant 0 : i32
    %c0_i32_1 = arith.constant 0 : i32
    return %c0_i32, %c0_i32_0 : i32, i32
  }
  func.func @transform_2(%arg0: i32) -> (i32, i32) {
    %c0_i32 = arith.constant 0 : i32
    %c0_i32_0 = arith.constant 0 : i32
    %c0_i32_1 = arith.constant 0 : i32
    return %c0_i32, %c0_i32_0 : i32, i32
  }
  func.func @transform_3(%arg0: i32) -> (i32, i32) {
    %c0_i32 = arith.constant 0 : i32
    %c0_i32_0 = arith.constant 0 : i32
    %c0_i32_1 = arith.constant 0 : i32
    return %c0_i32, %c0_i32_0 : i32, i32
  }
  func.func @transform_4(%arg0: i32) -> (i32, i32) {
    %c0_i32 = arith.constant 0 : i32
    %c0_i32_0 = arith.constant 0 : i32
    %c0_i32_1 = arith.constant 0 : i32
    return %c0_i32, %c0_i32_0 : i32, i32
  }
  func.func @transform_5(%arg0: i32) -> (i32, i32) {
    %c0_i32 = arith.constant 0 : i32
    %c0_i32_0 = arith.constant 0 : i32
    return %arg0, %c0_i32 : i32, i32
  }
}

</mosaic_0001>

<llo_original>
// kernel: tpu_custom_call.1
$region0: #{tpu_custom_call.1}
  #allocation0 [shape = 'u32[]', space=smem, size = 0x4, offset = 0x4, fixed_abs, tag = 'smem constant byte address 0x4 - core index']
  #allocation1 [shape = 'u32[144,128]{1,0:T(1,128)}', space=vmem, size = 0x12000, scoped, tag = 'internal scratch']
  %s0 = inlined_call_operand.hbm [shape: f32[64,64], index: 0, kind: input, shape index: {}]
  %s1 = inlined_call_operand.hbm [shape: f32[64,128], index: 1, kind: input, shape index: {}]
  %s2 = inlined_call_operand.vmem [shape: f32[1,128], index: 2, kind: input, shape index: {}]
  %s3 = inlined_call_operand.hbm [shape: f32[128,384], index: 3, kind: input, shape index: {}]
  %s4 = inlined_call_operand.vmem [shape: f32[1,384], index: 4, kind: input, shape index: {}]
  %s5 = inlined_call_operand.hbm [shape: f32[64,384], index: 5, kind: output, shape index: {}]
  %s6 = sld [smem:[#allocation0]]
  $region42: #{tpu_custom_call.1} parent=0
    _
  %s8 = ssub.s32 1, %s6
  %s9 = scalar_select 0, %s8, %s6
  $region1: #{tpu_custom_call.1} parent=0
    #allocation2 [shape = 'u8[32768]{0}', space=vmem, size = 0x8000, scoped, tag = 'input window, operand 0, single buffered']
    #allocation3 [shape = 's32[1]{0}', space=sflag, size = 0x4, scoped, tag = 'scoped memory for tpu_custom_call.1']
    #allocation4 [shape = 's32[1]{0}', space=sflag, size = 0x4, scoped, tag = 'scoped memory for tpu_custom_call.1']
    #allocation5 [shape = 'u8[32768]{0}', space=vmem, size = 0x8000, scoped, tag = 'input window, operand 1, single buffered']
    #allocation6 [shape = 's32[1]{0}', space=sflag, size = 0x4, scoped, tag = 'scoped memory for tpu_custom_call.1']
    #allocation7 [shape = 'u8[196608]{0}', space=vmem, size = 0x30000, scoped, tag = 'input window, operand 3, single buffered']
    #allocation8 [shape = 'u8[98304]{0}', space=vmem, size = 0x18000, scoped, tag = 'output window, operand 0, single buffered']
    %10 = vsyncpa [#allocation3], 0
    %11 = vsyncpa [#allocation6], 0
    %12 = vsyncpa [#allocation4], 0
    // Predicated region
    $region2: #{tpu_custom_call.1} parent=1 // pred_check
      _
    $region3: #{tpu_custom_call.1} parent=1 // pred_check_branch
      %14 = sbr.rel (0) target = $region5
    $region4: #{tpu_custom_call.1} parent=1 // pred_region
      %s16 = ssub.s32 1024, 1024
      %17 = vsyncadd [#allocation3], %s16
      %s18 = sshll.u32 [#allocation2], 4
      %s19 = int_to_ptr.vmem [resolvable:$true] %s18
      %24 = dma.hbm_to_vmem [thread:$0]  %s0, 1024, %s19, [#allocation3], 128, 128, 8
    $region5: #{tpu_custom_call.1} parent=1 // pred_fallthru
      _
    // Predicated region
    $region6: #{tpu_custom_call.1} parent=1 // pred_check
      _
    $region7: #{tpu_custom_call.1} parent=1 // pred_check_branch
      %26 = sbr.rel (0) target = $region9
    $region8: #{tpu_custom_call.1} parent=1 // pred_region
      %s28 = ssub.s32 1024, 1024
      %29 = vsyncadd [#allocation6], %s28
      %s30 = sshll.u32 [#allocation5], 4
      %s31 = int_to_ptr.vmem [resolvable:$true] %s30
      %36 = dma.hbm_to_vmem [thread:$0]  %s1, 1024, %s31, [#allocation6], 128, 128, 8
    $region9: #{tpu_custom_call.1} parent=1 // pred_fallthru
      _
    // Predicated region
    $region10: #{tpu_custom_call.1} parent=1 // pred_check
      _
    $region11: #{tpu_custom_call.1} parent=1 // pred_check_branch
      %38 = sbr.rel (0) target = $region13
    $region12: #{tpu_custom_call.1} parent=1 // pred_region
      _
    $region13: #{tpu_custom_call.1} parent=1 // pred_fallthru
      _
    // Predicated region
    $region14: #{tpu_custom_call.1} parent=1 // pred_check
      _
    $region15: #{tpu_custom_call.1} parent=1 // pred_check_branch
      %40 = sbr.rel (0) target = $region17
    $region16: #{tpu_custom_call.1} parent=1 // pred_region
      %s42 = ssub.s32 6144, 6144
      %43 = vsyncadd [#allocation6], %s42
      %s44 = sshll.u32 [#allocation7], 4
      %s45 = int_to_ptr.vmem [resolvable:$true] %s44
      %50 = dma.hbm_to_vmem [thread:$0]  %s3, 6144, %s45, [#allocation6], 384, 384, 24
    $region17: #{tpu_custom_call.1} parent=1 // pred_fallthru
      _
    // Predicated region
    $region18: #{tpu_custom_call.1} parent=1 // pred_check
      _
    $region19: #{tpu_custom_call.1} parent=1 // pred_check_branch
      %52 = sbr.rel (0) target = $region21
    $region20: #{tpu_custom_call.1} parent=1 // pred_region
      _
    $region21: #{tpu_custom_call.1} parent=1 // pred_fallthru
      _
    // Predicated region
    $region22: #{tpu_custom_call.1} parent=1 // pred_check
      _
    $region23: #{tpu_custom_call.1} parent=1 // pred_check_branch
      %54 = sbr.rel (0) target = $region25
    $region24: #{tpu_custom_call.1} parent=1 // pred_region
      %55 = dma.done [#allocation3], 1024
    $region25: #{tpu_custom_call.1} parent=1 // pred_fallthru
      _
    // Predicated region
    $region26: #{tpu_custom_call.1} parent=1 // pred_check
      _
    $region27: #{tpu_custom_call.1} parent=1 // pred_check_branch
      %57 = sbr.rel (0) target = $region29
    $region28: #{tpu_custom_call.1} parent=1 // pred_region
      %58 = dma.done [#allocation6], 1024
    $region29: #{tpu_custom_call.1} parent=1 // pred_fallthru
      _
    // Predicated region
    $region30: #{tpu_custom_call.1} parent=1 // pred_check
      _
    $region31: #{tpu_custom_call.1} parent=1 // pred_check_branch
      %60 = sbr.rel (0) target = $region33
    $region32: #{tpu_custom_call.1} parent=1 // pred_region
      %61 = dma.done [#allocation6], 6144
    $region33: #{tpu_custom_call.1} parent=1 // pred_fallthru
      _
    %v62 = vld [vmem:[#allocation2] sm:$0xff]
    %v63 = vld [vmem:[#allocation2 + $0x8] sm:$0xff]
    %v64 = vld [vmem:[#allocation2 + $0x10] sm:$0xff]
    %v65 = vld [vmem:[#allocation2 + $0x18] sm:$0xff]
    %v66 = vld [vmem:[#allocation2 + $0x20] sm:$0xff]
    %v67 = vld [vmem:[#allocation2 + $0x28] sm:$0xff]
    %v68 = vld [vmem:[#allocation2 + $0x30] sm:$0xff]
    %v69 = vld [vmem:[#allocation2 + $0x38] sm:$0xff]
    %v70 = vld [vmem:[#allocation5] sm:$0xff]
    %v71 = vld [vmem:[#allocation5 + $0x8] sm:$0xff]
    %v72 = vld [vmem:[#allocation5 + $0x10] sm:$0xff]
    %v73 = vld [vmem:[#allocation5 + $0x18] sm:$0xff]
    %v74 = vld [vmem:[#allocation5 + $0x20] sm:$0xff]
    %v75 = vld [vmem:[#allocation5 + $0x28] sm:$0xff]
    %v76 = vld [vmem:[#allocation5 + $0x30] sm:$0xff]
    %v77 = vld [vmem:[#allocation5 + $0x38] sm:$0xff]
    %v78 = vld [vmem:[%s2] sm:$0x1]
    %v80 = vlaneseq
    %v81 = vshrl.u32 %v80, 7
    %v82 = vsub.s32 0, %v81
    %v83 = vrot.slane %v78, %v82
    %vm85 = vcmask 523264
    %v87 = vsel %vm85, %v62, 0
    %v90 = vsel %vm85, %v63, 0
    %v93 = vsel %vm85, %v64, 0
    %v96 = vsel %vm85, %v65, 0
    %v99 = vsel %vm85, %v66, 0
    %v102 = vsel %vm85, %v67, 0
    %v105 = vsel %vm85, %v68, 0
    %v108 = vsel %vm85, %v69, 0
    %110 = vmatprep.subr.mxu0 0.0
    %111 = vmatpush1.msra.mxu0 %v70
    %112 = vmatprep.subr.mxu0 0.0
    %113 = vmatpush1.msra.mxu0 %v71
    %114 = vmatprep.subr.mxu0 0.0
    %115 = vmatpush1.msra.mxu0 %v72
    %116 = vmatprep.subr.mxu0 0.0
    %117 = vmatpush1.msra.mxu0 %v73
    %118 = vmatprep.subr.mxu0 0.0
    %119 = vmatpush1.msra.mxu0 %v74
    %120 = vmatprep.subr.mxu0 0.0
    %121 = vmatpush1.msra.mxu0 %v75
    %122 = vmatprep.subr.mxu0 0.0
    %123 = vmatpush1.msra.mxu0 %v76
    %124 = vmatprep.subr.mxu0 0.0
    %125 = vmatpush1.msra.mxu0 %v77
    %126 = vmatprep.subr.mxu0 0.0
    %127 = vmatpush1.msra.mxu0 0.0
    %128 = vmatprep.subr.mxu0 0.0
    %129 = vmatpush1.msra.mxu0 0.0
    %130 = vmatprep.subr.mxu0 0.0
    %131 = vmatpush1.msra.mxu0 0.0
    %132 = vmatprep.subr.mxu0 0.0
    %133 = vmatpush1.msra.mxu0 0.0
    %134 = vmatprep.subr.mxu0 0.0
    %135 = vmatpush1.msra.mxu0 0.0
    %136 = vmatprep.subr.mxu0 0.0
    %137 = vmatpush1.msra.mxu0 0.0
    %138 = vmatprep.subr.mxu0 0.0
    %139 = vmatpush1.msra.mxu0 0.0
    %140 = vmatprep.subr.mxu0 0.0
    %141 = vmatpush1.msra.mxu0 0.0
    %142 = vmatprep.subr.mxu0 0.0
    %143 = vmatpush1.msra.mxu0 0.0
    %144 = vmatprep.subr.mxu0 0.0
    %145 = vmatpush1.msra.mxu0 0.0
    %146 = vmatprep.subr.mxu0 0.0
    %147 = vmatpush1.msra.mxu0 0.0
    %148 = vmatprep.subr.mxu0 0.0
    %149 = vmatpush1.msra.mxu0 0.0
    %150 = vmatprep.subr.mxu0 0.0
    %151 = vmatpush1.msra.mxu0 0.0
    %152 = vmatprep.subr.mxu0 0.0
    %153 = vmatpush1.msra.mxu0 0.0
    %154 = vmatprep.subr.mxu0 0.0
    %155 = vmatpush1.msra.mxu0 0.0
    %156 = vmatprep.subr.mxu0 0.0
    %157 = vmatpush1.msra.mxu0 0.0
    %158 = vmatprep.subr.mxu0 0.0
    %159 = vmatpush1.msra.mxu0 0.0
    %160 = vmatprep.subr.mxu0 0.0
    %161 = vmatpush1.msra.mxu0 0.0
    %162 = vmatprep.subr.mxu0 0.0
    %163 = vmatpush1.msra.mxu0 0.0
    %164 = vmatprep.subr.mxu0 0.0
    %165 = vmatpush1.msra.mxu0 0.0
    %166 = vmatprep.subr.mxu0 0.0
    %167 = vmatpush1.msra.mxu0 0.0
    %168 = vmatprep.subr.mxu0 0.0
    %169 = vmatpush1.msra.mxu0 0.0
    %170 = vmatprep.subr.mxu0 0.0
    %171 = vmatpush1.msra.mxu0 0.0
    %172 = vmatprep.subr.mxu0 0.0
    %173 = vmatpush1.msra.mxu0 0.0
    %174 = vmatprep.mubr.f32.mxu0 0.0
    %175 = vmatmul.mubr.f32.gmra.mrb[0].mxu0 %v87
    %v176 = vpop.f32.mrb[0].mxu0
    %v177 = vadd.f32 %v83, %v176
    %v178 = vpop.f32.mrb[0].mxu0
    %179 = vmatprep.mubr.f32.mxu0 0.0
    %180 = vmatmul.mubr.f32.gmra.mrb[0].mxu0 %v90
    %v181 = vpop.f32.mrb[0].mxu0
    %v182 = vadd.f32 %v83, %v181
    %v183 = vpop.f32.mrb[0].mxu0
    %184 = vmatprep.mubr.f32.mxu0 0.0
    %185 = vmatmul.mubr.f32.gmra.mrb[0].mxu0 %v93
    %v186 = vpop.f32.mrb[0].mxu0
    %v187 = vadd.f32 %v83, %v186
    %v188 = vpop.f32.mrb[0].mxu0
    %189 = vmatprep.mubr.f32.mxu0 0.0
    %190 = vmatmul.mubr.f32.gmra.mrb[0].mxu0 %v96
    %v191 = vpop.f32.mrb[0].mxu0
    %v192 = vadd.f32 %v83, %v191
    %v193 = vpop.f32.mrb[0].mxu0
    %194 = vmatprep.mubr.f32.mxu0 0.0
    %195 = vmatmul.mubr.f32.gmra.mrb[0].mxu0 %v99
    %v196 = vpop.f32.mrb[0].mxu0
    %v197 = vadd.f32 %v83, %v196
    %v198 = vpop.f32.mrb[0].mxu0
    %199 = vmatprep.mubr.f32.mxu0 0.0
    %200 = vmatmul.mubr.f32.gmra.mrb[0].mxu0 %v102
    %v201 = vpop.f32.mrb[0].mxu0
    %v202 = vadd.f32 %v83, %v201
    %v203 = vpop.f32.mrb[0].mxu0
    %204 = vmatprep.mubr.f32.mxu0 0.0
    %205 = vmatmul.mubr.f32.gmra.mrb[0].mxu0 %v105
    %v206 = vpop.f32.mrb[0].mxu0
    %v207 = vadd.f32 %v83, %v206
    %v208 = vpop.f32.mrb[0].mxu0
    %209 = vmatprep.mubr.f32.mxu0 0.0
    %210 = vmatmul.mubr.f32.gmra.mrb[0].mxu0 %v108
    %v211 = vpop.f32.mrb[0].mxu0
    %v212 = vadd.f32 %v83, %v211
    %v213 = vpop.f32.mrb[0].mxu0
    %214 = vdwg.mxu0
    %v215 = vld [vmem:[#allocation7] sm:$0xff]
    %v216 = vld [vmem:[#allocation7 + $0x8] sm:$0xff]
    %v217 = vld [vmem:[#allocation7 + $0x10] sm:$0xff]
    %v218 = vld [vmem:[#allocation7 + $0x18] sm:$0xff]
    %v219 = vld [vmem:[#allocation7 + $0x20] sm:$0xff]
    %v220 = vld [vmem:[#allocation7 + $0x28] sm:$0xff]
    %v221 = vld [vmem:[#allocation7 + $0x30] sm:$0xff]
    %v222 = vld [vmem:[#allocation7 + $0x38] sm:$0xff]
    %v223 = vld [vmem:[#allocation7 + $0x40] sm:$0xff]
    %v224 = vld [vmem:[#allocation7 + $0x48] sm:$0xff]
    %v225 = vld [vmem:[#allocation7 + $0x50] sm:$0xff]
    %v226 = vld [vmem:[#allocation7 + $0x58] sm:$0xff]
    %v227 = vld [vmem:[#allocation7 + $0x60] sm:$0xff]
    %v228 = vld [vmem:[#allocation7 + $0x68] sm:$0xff]
    %v229 = vld [vmem:[#allocation7 + $0x70] sm:$0xff]
    %v230 = vld [vmem:[#allocation7 + $0x78] sm:$0xff]
    %v231 = vld [vmem:[#allocation7 + $0x80] sm:$0xff]
    %v232 = vld [vmem:[#allocation7 + $0x88] sm:$0xff]
    %v233 = vld [vmem:[#allocation7 + $0x90] sm:$0xff]
    %v234 = vld [vmem:[#allocation7 + $0x98] sm:$0xff]
    %v235 = vld [vmem:[#allocation7 + $0xa0] sm:$0xff]
    %v236 = vld [vmem:[#allocation7 + $0xa8] sm:$0xff]
    %v237 = vld [vmem:[#allocation7 + $0xb0] sm:$0xff]
    %v238 = vld [vmem:[#allocation7 + $0xb8] sm:$0xff]
    %v239 = vld [vmem:[#allocation7 + $0xc0] sm:$0xff]
    %v240 = vld [vmem:[#allocation7 + $0xc8] sm:$0xff]
    %v241 = vld [vmem:[#allocation7 + $0xd0] sm:$0xff]
    %v242 = vld [vmem:[#allocation7 + $0xd8] sm:$0xff]
    %v243 = vld [vmem:[#allocation7 + $0xe0] sm:$0xff]
    %v244 = vld [vmem:[#allocation7 + $0xe8] sm:$0xff]
    %v245 = vld [vmem:[#allocation7 + $0xf0] sm:$0xff]
    %v246 = vld [vmem:[#allocation7 + $0xf8] sm:$0xff]
    %v247 = vld [vmem:[#allocation7 + $0x100] sm:$0xff]
    %v248 = vld [vmem:[#allocation7 + $0x108] sm:$0xff]
    %v249 = vld [vmem:[#allocation7 + $0x110] sm:$0xff]
    %v250 = vld [vmem:[#allocation7 + $0x118] sm:$0xff]
    %v251 = vld [vmem:[#allocation7 + $0x120] sm:$0xff]
    %v252 = vld [vmem:[#allocation7 + $0x128] sm:$0xff]
    %v253 = vld [vmem:[#allocation7 + $0x130] sm:$0xff]
    %v254 = vld [vmem:[#allocation7 + $0x138] sm:$0xff]
    %v255 = vld [vmem:[#allocation7 + $0x140] sm:$0xff]
    %v256 = vld [vmem:[#allocation7 + $0x148] sm:$0xff]
    %v257 = vld [vmem:[#allocation7 + $0x150] sm:$0xff]
    %v258 = vld [vmem:[#allocation7 + $0x158] sm:$0xff]
    %v259 = vld [vmem:[#allocation7 + $0x160] sm:$0xff]
    %v260 = vld [vmem:[#allocation7 + $0x168] sm:$0xff]
    %v261 = vld [vmem:[#allocation7 + $0x170] sm:$0xff]
    %v262 = vld [vmem:[#allocation7 + $0x178] sm:$0xff]
    %v263 = vld [vmem:[%s4] sm:$0x7]
    %v265 = vlaneseq
    %v266 = vshrl.u32 %v265, 7
    %v267 = vsub.s32 0, %v266
    %v268 = vrot.slane %v263, %v267
    %v269 = vlaneseq
    %v270 = vshrl.u32 %v269, 7
    %v271 = vsub.s32 1, %v270
    %v272 = vrot.slane %v263, %v271
    %v273 = vlaneseq
    %v274 = vshrl.u32 %v273, 7
    %v275 = vsub.s32 2, %v274
    %v276 = vrot.slane %v263, %v275
    %280 = vmatprep.subr.mxu0 %v216
    %281 = vmatpush1.msra.mxu0 %v215
    %282 = vmatprep.subr.mxu0 %v219
    %283 = vmatpush1.msra.mxu0 %v218
    %284 = vmatprep.subr.mxu0 %v222
    %285 = vmatpush1.msra.mxu0 %v221
    %286 = vmatprep.subr.mxu0 %v225
    %287 = vmatpush1.msra.mxu0 %v224
    %288 = vmatprep.subr.mxu0 %v228
    %289 = vmatpush1.msra.mxu0 %v227
    %290 = vmatprep.subr.mxu0 %v231
    %291 = vmatpush1.msra.mxu0 %v230
    %292 = vmatprep.subr.mxu0 %v234
    %293 = vmatpush1.msra.mxu0 %v233
    %294 = vmatprep.subr.mxu0 %v237
    %295 = vmatpush1.msra.mxu0 %v236
    %296 = vmatprep.subr.mxu0 %v240
    %297 = vmatpush1.msra.mxu0 %v239
    %298 = vmatprep.subr.mxu0 %v243
    %299 = vmatpush1.msra.mxu0 %v242
    %300 = vmatprep.subr.mxu0 %v246
    %301 = vmatpush1.msra.mxu0 %v245
    %302 = vmatprep.subr.mxu0 %v249
    %303 = vmatpush1.msra.mxu0 %v248
    %304 = vmatprep.subr.mxu0 %v252
    %305 = vmatpush1.msra.mxu0 %v251
    %306 = vmatprep.subr.mxu0 %v255
    %307 = vmatpush1.msra.mxu0 %v254
    %308 = vmatprep.subr.mxu0 %v258
    %309 = vmatpush1.msra.mxu0 %v257
    %310 = vmatprep.subr.mxu0 %v261
    %311 = vmatpush1.msra.mxu0 %v260
    %312 = vmatprep.subr.mxu0 0.0
    %313 = vmatpush1.msra.mxu0 0.0
    %314 = vmatprep.subr.mxu0 0.0
    %315 = vmatpush1.msra.mxu0 0.0
    %316 = vmatprep.subr.mxu0 0.0
    %317 = vmatpush1.msra.mxu0 0.0
    %318 = vmatprep.subr.mxu0 0.0
    %319 = vmatpush1.msra.mxu0 0.0
    %320 = vmatprep.subr.mxu0 0.0
    %321 = vmatpush1.msra.mxu0 0.0
    %322 = vmatprep.subr.mxu0 0.0
    %323 = vmatpush1.msra.mxu0 0.0
    %324 = vmatprep.subr.mxu0 0.0
    %325 = vmatpush1.msra.mxu0 0.0
    %326 = vmatprep.subr.mxu0 0.0
    %327 = vmatpush1.msra.mxu0 0.0
    %328 = vmatprep.subr.mxu0 0.0
    %329 = vmatpush1.msra.mxu0 0.0
    %330 = vmatprep.subr.mxu0 0.0
    %331 = vmatpush1.msra.mxu0 0.0
    %332 = vmatprep.subr.mxu0 0.0
    %333 = vmatpush1.msra.mxu0 0.0
    %334 = vmatprep.subr.mxu0 0.0
    %335 = vmatpush1.msra.mxu0 0.0
    %336 = vmatprep.subr.mxu0 0.0
    %337 = vmatpush1.msra.mxu0 0.0
    %338 = vmatprep.subr.mxu0 0.0
    %339 = vmatpush1.msra.mxu0 0.0
    %340 = vmatprep.subr.mxu0 0.0
    %341 = vmatpush1.msra.mxu0 0.0
    %342 = vmatprep.subr.mxu0 0.0
    %343 = vmatpush1.msra.mxu0 0.0
    %344 = vmatprep.mubr.f32.mxu0 0.0
    %345 = vmatmul.mubr.f32.gmra.mrb[0].mxu0 %v177
    %v346 = vpop.f32.mrb[0].mxu0
    %v347 = vadd.f32 %v268, %v346
    %v348 = vpop.f32.mrb[0].mxu0
    %v349 = vadd.f32 %v272, %v348
    %350 = vmatprep.mubr.f32.mxu0 0.0
    %351 = vmatmul.mubr.f32.gmra.mrb[0].mxu0 %v182
    %v352 = vpop.f32.mrb[0].mxu0
    %v353 = vadd.f32 %v268, %v352
    %v354 = vpop.f32.mrb[0].mxu0
    %v355 = vadd.f32 %v272, %v354
    %356 = vmatprep.mubr.f32.mxu0 0.0
    %357 = vmatmul.mubr.f32.gmra.mrb[0].mxu0 %v187
    %v358 = vpop.f32.mrb[0].mxu0
    %v359 = vadd.f32 %v268, %v358
    %v360 = vpop.f32.mrb[0].mxu0
    %v361 = vadd.f32 %v272, %v360
    %362 = vmatprep.mubr.f32.mxu0 0.0
    %363 = vmatmul.mubr.f32.gmra.mrb[0].mxu0 %v192
    %v364 = vpop.f32.mrb[0].mxu0
    %v365 = vadd.f32 %v268, %v364
    %v366 = vpop.f32.mrb[0].mxu0
    %v367 = vadd.f32 %v272, %v366
    %368 = vmatprep.mubr.f32.mxu0 0.0
    %369 = vmatmul.mubr.f32.gmra.mrb[0].mxu0 %v197
    %v370 = vpop.f32.mrb[0].mxu0
    %v371 = vadd.f32 %v268, %v370
    %v372 = vpop.f32.mrb[0].mxu0
    %v373 = vadd.f32 %v272, %v372
    %374 = vmatprep.mubr.f32.mxu0 0.0
    %375 = vmatmul.mubr.f32.gmra.mrb[0].mxu0 %v202
    %v376 = vpop.f32.mrb[0].mxu0
    %v377 = vadd.f32 %v268, %v376
    %v378 = vpop.f32.mrb[0].mxu0
    %v379 = vadd.f32 %v272, %v378
    %380 = vmatprep.mubr.f32.mxu0 0.0
    %381 = vmatmul.mubr.f32.gmra.mrb[0].mxu0 %v207
    %v382 = vpop.f32.mrb[0].mxu0
    %v383 = vadd.f32 %v268, %v382
    %v384 = vpop.f32.mrb[0].mxu0
    %v385 = vadd.f32 %v272, %v384
    %386 = vmatprep.mubr.f32.mxu0 0.0
    %387 = vmatmul.mubr.f32.gmra.mrb[0].mxu0 %v212
    %v388 = vpop.f32.mrb[0].mxu0
    %v389 = vadd.f32 %v268, %v388
    %v390 = vpop.f32.mrb[0].mxu0
    %v391 = vadd.f32 %v272, %v390
    %392 = vdwg.mxu0
    %393 = vmatprep.subr.mxu0 0.0
    %394 = vmatpush1.msra.mxu0 %v217
    %395 = vmatprep.subr.mxu0 0.0
    %396 = vmatpush1.msra.mxu0 %v220
    %397 = vmatprep.subr.mxu0 0.0
    %398 = vmatpush1.msra.mxu0 %v223
    %399 = vmatprep.subr.mxu0 0.0
    %400 = vmatpush1.msra.mxu0 %v226
    %401 = vmatprep.subr.mxu0 0.0
    %402 = vmatpush1.msra.mxu0 %v229
    %403 = vmatprep.subr.mxu0 0.0
    %404 = vmatpush1.msra.mxu0 %v232
    %405 = vmatprep.subr.mxu0 0.0
    %406 = vmatpush1.msra.mxu0 %v235
    %407 = vmatprep.subr.mxu0 0.0
    %408 = vmatpush1.msra.mxu0 %v238
    %409 = vmatprep.subr.mxu0 0.0
    %410 = vmatpush1.msra.mxu0 %v241
    %411 = vmatprep.subr.mxu0 0.0
    %412 = vmatpush1.msra.mxu0 %v244
    %413 = vmatprep.subr.mxu0 0.0
    %414 = vmatpush1.msra.mxu0 %v247
    %415 = vmatprep.subr.mxu0 0.0
    %416 = vmatpush1.msra.mxu0 %v250
    %417 = vmatprep.subr.mxu0 0.0
    %418 = vmatpush1.msra.mxu0 %v253
    %419 = vmatprep.subr.mxu0 0.0
    %420 = vmatpush1.msra.mxu0 %v256
    %421 = vmatprep.subr.mxu0 0.0
    %422 = vmatpush1.msra.mxu0 %v259
    %423 = vmatprep.subr.mxu0 0.0
    %424 = vmatpush1.msra.mxu0 %v262
    %425 = vmatprep.subr.mxu0 0.0
    %426 = vmatpush1.msra.mxu0 0.0
    %427 = vmatprep.subr.mxu0 0.0
    %428 = vmatpush1.msra.mxu0 0.0
    %429 = vmatprep.subr.mxu0 0.0
    %430 = vmatpush1.msra.mxu0 0.0
    %431 = vmatprep.subr.mxu0 0.0
    %432 = vmatpush1.msra.mxu0 0.0
    %433 = vmatprep.subr.mxu0 0.0
    %434 = vmatpush1.msra.mxu0 0.0
    %435 = vmatprep.subr.mxu0 0.0
    %436 = vmatpush1.msra.mxu0 0.0
    %437 = vmatprep.subr.mxu0 0.0
    %438 = vmatpush1.msra.mxu0 0.0
    %439 = vmatprep.subr.mxu0 0.0
    %440 = vmatpush1.msra.mxu0 0.0
    %441 = vmatprep.subr.mxu0 0.0
    %442 = vmatpush1.msra.mxu0 0.0
    %443 = vmatprep.subr.mxu0 0.0
    %444 = vmatpush1.msra.mxu0 0.0
    %445 = vmatprep.subr.mxu0 0.0
    %446 = vmatpush1.msra.mxu0 0.0
    %447 = vmatprep.subr.mxu0 0.0
    %448 = vmatpush1.msra.mxu0 0.0
    %449 = vmatprep.subr.mxu0 0.0
    %450 = vmatpush1.msra.mxu0 0.0
    %451 = vmatprep.subr.mxu0 0.0
    %452 = vmatpush1.msra.mxu0 0.0
    %453 = vmatprep.subr.mxu0 0.0
    %454 = vmatpush1.msra.mxu0 0.0
    %455 = vmatprep.subr.mxu0 0.0
    %456 = vmatpush1.msra.mxu0 0.0
    %457 = vmatprep.mubr.f32.mxu0 0.0
    %458 = vmatmul.mubr.f32.gmra.mrb[0].mxu0 %v177
    %v459 = vpop.f32.mrb[0].mxu0
    %v460 = vadd.f32 %v276, %v459
    %v461 = vpop.f32.mrb[0].mxu0
    %462 = vmatprep.mubr.f32.mxu0 0.0
    %463 = vmatmul.mubr.f32.gmra.mrb[0].mxu0 %v182
    %v464 = vpop.f32.mrb[0].mxu0
    %v465 = vadd.f32 %v276, %v464
    %v466 = vpop.f32.mrb[0].mxu0
    %467 = vmatprep.mubr.f32.mxu0 0.0
    %468 = vmatmul.mubr.f32.gmra.mrb[0].mxu0 %v187
    %v469 = vpop.f32.mrb[0].mxu0
    %v470 = vadd.f32 %v276, %v469
    %v471 = vpop.f32.mrb[0].mxu0
    %472 = vmatprep.mubr.f32.mxu0 0.0
    %473 = vmatmul.mubr.f32.gmra.mrb[0].mxu0 %v192
    %v474 = vpop.f32.mrb[0].mxu0
    %v475 = vadd.f32 %v276, %v474
    %v476 = vpop.f32.mrb[0].mxu0
    %477 = vmatprep.mubr.f32.mxu0 0.0
    %478 = vmatmul.mubr.f32.gmra.mrb[0].mxu0 %v197
    %v479 = vpop.f32.mrb[0].mxu0
    %v480 = vadd.f32 %v276, %v479
    %v481 = vpop.f32.mrb[0].mxu0
    %482 = vmatprep.mubr.f32.mxu0 0.0
    %483 = vmatmul.mubr.f32.gmra.mrb[0].mxu0 %v202
    %v484 = vpop.f32.mrb[0].mxu0
    %v485 = vadd.f32 %v276, %v484
    %v486 = vpop.f32.mrb[0].mxu0
    %487 = vmatprep.mubr.f32.mxu0 0.0
    %488 = vmatmul.mubr.f32.gmra.mrb[0].mxu0 %v207
    %v489 = vpop.f32.mrb[0].mxu0
    %v490 = vadd.f32 %v276, %v489
    %v491 = vpop.f32.mrb[0].mxu0
    %492 = vmatprep.mubr.f32.mxu0 0.0
    %493 = vmatmul.mubr.f32.gmra.mrb[0].mxu0 %v212
    %v494 = vpop.f32.mrb[0].mxu0
    %v495 = vadd.f32 %v276, %v494
    %v496 = vpop.f32.mrb[0].mxu0
    %497 = vdwg.mxu0
    %498 = vst [vmem:[#allocation8] sm:$0xff] %v347
    %499 = vst [vmem:[#allocation8 + $0x8] sm:$0xff] %v349
    %500 = vst [vmem:[#allocation8 + $0x10] sm:$0xff] %v460
    %501 = vst [vmem:[#allocation8 + $0x18] sm:$0xff] %v353
    %502 = vst [vmem:[#allocation8 + $0x20] sm:$0xff] %v355
    %503 = vst [vmem:[#allocation8 + $0x28] sm:$0xff] %v465
    %504 = vst [vmem:[#allocation8 + $0x30] sm:$0xff] %v359
    %505 = vst [vmem:[#allocation8 + $0x38] sm:$0xff] %v361
    %506 = vst [vmem:[#allocation8 + $0x40] sm:$0xff] %v470
    %507 = vst [vmem:[#allocation8 + $0x48] sm:$0xff] %v365
    %508 = vst [vmem:[#allocation8 + $0x50] sm:$0xff] %v367
    %509 = vst [vmem:[#allocation8 + $0x58] sm:$0xff] %v475
    %510 = vst [vmem:[#allocation8 + $0x60] sm:$0xff] %v371
    %511 = vst [vmem:[#allocation8 + $0x68] sm:$0xff] %v373
    %512 = vst [vmem:[#allocation8 + $0x70] sm:$0xff] %v480
    %513 = vst [vmem:[#allocation8 + $0x78] sm:$0xff] %v377
    %514 = vst [vmem:[#allocation8 + $0x80] sm:$0xff] %v379
    %515 = vst [vmem:[#allocation8 + $0x88] sm:$0xff] %v485
    %516 = vst [vmem:[#allocation8 + $0x90] sm:$0xff] %v383
    %517 = vst [vmem:[#allocation8 + $0x98] sm:$0xff] %v385
    %518 = vst [vmem:[#allocation8 + $0xa0] sm:$0xff] %v490
    %519 = vst [vmem:[#allocation8 + $0xa8] sm:$0xff] %v389
    %520 = vst [vmem:[#allocation8 + $0xb0] sm:$0xff] %v391
    %521 = vst [vmem:[#allocation8 + $0xb8] sm:$0xff] %v495
    // Predicated region
    $region34: #{tpu_custom_call.1} parent=1 // pred_check
      _
    $region35: #{tpu_custom_call.1} parent=1 // pred_check_branch
      %523 = sbr.rel (0) target = $region37
    $region36: #{tpu_custom_call.1} parent=1 // pred_region
      %s525 = ssub.s32 3072, 3072
      %526 = vsyncadd [#allocation4], %s525
      %s527 = sshll.u32 [#allocation8], 4
      %s528 = int_to_ptr.vmem [resolvable:$true] %s527
      %533 = dma.vmem_to_hbm [thread:$0]  %s528, 3072, %s5, [#allocation4], 384, 384, 24
    $region37: #{tpu_custom_call.1} parent=1 // pred_fallthru
      _
    // Predicated region
    $region38: #{tpu_custom_call.1} parent=1 // pred_check
      _
    $region39: #{tpu_custom_call.1} parent=1 // pred_check_branch
      %535 = sbr.rel (0) target = $region41
    $region40: #{tpu_custom_call.1} parent=1 // pred_region
      %536 = dma.done [#allocation4], 3072
    $region41: #{tpu_custom_call.1} parent=1 // pred_fallthru
      _
    %537 = vsyncpa [#allocation3], 1
    %538 = vsyncpa [#allocation6], 1
    %539 = vsyncpa [#allocation4], 1

</llo_original>
